<compile_context>
chip_gen: v7x
topology: tpu7x:2x2x1
jax: 0.10.0
libtpu: 0.0.40
codegen_flags: <defaults>
</compile_context>

<pallas_src>
import jax
import jax.numpy as jnp
from jax.experimental import pallas as pl
from jax.experimental.pallas import tpu as pltpu

HPAD = 16  # common zero-padded hidden width (>= max layer width 15, multiple of 8)


def _round_up(n, m):
    return ((n + m - 1) // m) * m


def mlp_kernel(x_ref, w1_ref, wmid_ref, small_ref, o_ref):
    x = x_ref[...]          # (tb, feat)  -- batch on sublanes, as stored in HBM
    sm = small_ref[...]     # (HPAD, 8): cols 0..4 = b1..b5 (zero padded), col 5 = fc5 weight

    # fc1 -> tanh.  dot_general contracts both last dims (A @ B^T), putting the
    # batch axis on lanes: result is (HPAD, tb).  Dropout = identity (eval mode).
    h = jnp.tanh(
        jax.lax.dot_general(
            w1_ref[...], x,
            dimension_numbers=(((1,), (1,)), ((), ())),
            preferred_element_type=jnp.float32,
        )
        + sm[:, 0:1]
    )
    # fc2 -> tanh  (dropout = identity in eval mode)
    h = jnp.tanh(jnp.dot(wmid_ref[0], h, preferred_element_type=jnp.float32)
                 + sm[:, 1:2])
    # fc3 -> tanh
    h = jnp.tanh(jnp.dot(wmid_ref[1], h, preferred_element_type=jnp.float32)
                 + sm[:, 2:3])
    # fc4 -> tanh
    h = jnp.tanh(jnp.dot(wmid_ref[2], h, preferred_element_type=jnp.float32)
                 + sm[:, 3:4])
    # fc5 (3 -> 1): elementwise mul + sublane reduce on the VPU/XLU.
    logit = jnp.sum(h * sm[:, 5:6], axis=0, keepdims=True) + sm[0:1, 4:5]  # (1, tb)
    o_ref[...] = jax.nn.sigmoid(logit)  # lane-dense (1, tb) store


def pack_params(params, input_features, hpad=HPAD):
    """Pack 5 (W, b) pairs (W stored (in, out)) into 3 zero-padded slabs.

    w1t   : (hpad, input_features)   fc1 weight in (out, in) form, rows >=15 zero
    wmid  : (3, hpad, hpad)          fc2/fc3/fc4 weights in (out, in) form, zero padded
    small : (hpad, 8)                cols 0-4 = b1..b5 (zero padded down the column),
                                     col 5   = fc5 weight (3 values)
    Zero padding keeps padded rows exactly zero through every tanh layer
    (tanh(0)=0), so no in-kernel slicing is needed.
    """
    (w1, b1), (w2, b2), (w3, b3), (w4, b4), (w5, b5) = params
    w1t = jnp.zeros((hpad, input_features), jnp.float32).at[:15, :].set(w1.T)
    wmid = jnp.zeros((3, hpad, hpad), jnp.float32)
    wmid = wmid.at[0, :8, :15].set(w2.T)
    wmid = wmid.at[1, :6, :8].set(w3.T)
    wmid = wmid.at[2, :3, :6].set(w4.T)
    small = jnp.zeros((hpad, 8), jnp.float32)
    small = small.at[:15, 0].set(b1.reshape(-1))
    small = small.at[:8, 1].set(b2.reshape(-1))
    small = small.at[:6, 2].set(b3.reshape(-1))
    small = small.at[:3, 3].set(b4.reshape(-1))
    small = small.at[:1, 4].set(b5.reshape(-1))
    small = small.at[:3, 5].set(w5.reshape(-1))
    return w1t, wmid, small


def mlp_forward(x, params, *, tile_b=4096):
    batch, feat = x.shape
    w1t, wmid, small = pack_params(params, feat)

    # Batch tile: multiple of 128 (batch lands on lanes of the output block).
    pad_min = _round_up(batch, 128)
    if pad_min > tile_b:
        tb = tile_b
    elif pad_min >= 256:
        tb = _round_up(pad_min // 2, 128)  # >= 2 grid steps -> both v7x TCs get work
    else:
        tb = pad_min
    pad_batch = _round_up(batch, tb)
    if pad_batch != batch:
        x = jnp.pad(x, ((0, pad_batch - batch), (0, 0)))
    grid = (pad_batch // tb,)

    cost = pl.CostEstimate(
        flops=2 * pad_batch * (feat * 15 + 15 * 8 + 8 * 6 + 6 * 3 + 3 * 1),
        transcendentals=pad_batch * (15 + 8 + 6 + 3 + 1),
        bytes_accessed=4 * (pad_batch * feat + w1t.size + wmid.size
                            + small.size + pad_batch),
    )

    out = pl.pallas_call(
        mlp_kernel,
        out_shape=jax.ShapeDtypeStruct((1, pad_batch), jnp.float32),
        grid_spec=pltpu.PrefetchScalarGridSpec(
            num_scalar_prefetch=0,
            grid=grid,
            in_specs=[
                pl.BlockSpec((tb, feat), lambda i: (i, 0)),          # x tile
                pl.BlockSpec((HPAD, feat), lambda i: (0, 0)),        # fc1 weight (out,in)
                pl.BlockSpec((3, HPAD, HPAD), lambda i: (0, 0, 0)),  # fc2..fc4 weights
                pl.BlockSpec((HPAD, 8), lambda i: (0, 0)),           # biases + fc5 row
            ],
            out_specs=pl.BlockSpec((1, tb), lambda i: (0, i)),       # lane-dense row
        ),
        compiler_params=pltpu.CompilerParams(
            dimension_semantics=("parallel",),
        ),
        cost_estimate=cost,
    )(x, w1t, wmid, small)
    return out[0, :batch].reshape(batch, 1)


def init_params(key, input_features):
    """Deterministic init mirroring nn.Linear shapes; weights stored transposed (in, out)."""
    dims = [(input_features, 15), (15, 8), (8, 6), (6, 3), (3, 1)]
    params = []
    for i, (fan_in, fan_out) in enumerate(dims):
        kw, kb = jax.random.split(jax.random.fold_in(key, i))
        bound = 1.0 / jnp.sqrt(float(fan_in))
        w = jax.random.uniform(kw, (fan_in, fan_out), jnp.float32, -bound, bound)
        b = jax.random.uniform(kb, (1, fan_out), jnp.float32, -bound, bound)
        params.append((w, b))
    return params


def reference_forward(x, params):
    h = x
    for i, (w, b) in enumerate(params):
        h = h @ w + b
        h = jnp.tanh(h) if i < 4 else jax.nn.sigmoid(h)
    return h


if __name__ == "__main__":
    key = jax.random.PRNGKey(0)
    batch, input_features = 256, 32   # -> tb=128, grid=(2,)

    kx, kp = jax.random.split(key)
    x = jax.random.normal(kx, (batch, input_features), jnp.float32)
    params = init_params(kp, input_features)

    out = mlp_forward(x, params)
    out = jax.block_until_ready(out)

    ref = reference_forward(x, params)
    assert out.shape == (batch, 1)
    assert jnp.allclose(out, ref, atol=1e-5, rtol=1e-5)

    print("KERNEL_OK")
</pallas_src>

<mosaic_0001>
module attributes {stable_mosaic.version = 11 : i64} {
  func.func @mlp_kernel(%arg0: i32, %arg1: memref<128x32xf32, #tpu.memory_space<vmem>>, %arg2: memref<16x32xf32, #tpu.memory_space<vmem>>, %arg3: memref<3x16x16xf32, #tpu.memory_space<vmem>>, %arg4: memref<16x8xf32, #tpu.memory_space<vmem>>, %arg5: memref<1x128xf32, #tpu.memory_space<vmem>>) attributes {dimension_semantics = [#tpu.dimension_semantics<parallel>], iteration_bounds = array<i64: 2>, scalar_prefetch = 0 : i64, scratch_operands = 0 : i64, tpu.core_type = #tpu.core_type<tc>, window_params = [{transform_indices = @transform_0, window_bounds = array<i64: 128, 32>}, {pipeline_mode = #tpu.pipeline_mode<synchronous>, transform_indices = @transform_1, window_bounds = array<i64: 16, 32>}, {pipeline_mode = #tpu.pipeline_mode<synchronous>, transform_indices = @transform_2, window_bounds = array<i64: 3, 16, 16>}, {pipeline_mode = #tpu.pipeline_mode<synchronous>, transform_indices = @transform_3, window_bounds = array<i64: 16, 8>}, {transform_indices = @transform_4, window_bounds = array<i64: 1, 128>}]} {
    %c0 = arith.constant 0 : index
    %c0_0 = arith.constant 0 : index
    %0 = vector.load %arg1[%c0, %c0_0] : memref<128x32xf32, #tpu.memory_space<vmem>>, vector<128x32xf32>
    %c0_1 = arith.constant 0 : index
    %c0_2 = arith.constant 0 : index
    %1 = vector.load %arg4[%c0_1, %c0_2] : memref<16x8xf32, #tpu.memory_space<vmem>>, vector<16x8xf32>
    %c0_3 = arith.constant 0 : index
    %c0_4 = arith.constant 0 : index
    %2 = vector.load %arg2[%c0_3, %c0_4] : memref<16x32xf32, #tpu.memory_space<vmem>>, vector<16x32xf32>
    %cst = arith.constant dense<0.000000e+00> : vector<16x128xf32>
    %3 = tpu.matmul %2, %0, %cst {dimension_numbers = #tpu.dot_dimension_numbers<[1], [1], [0], [0], [0, 0, 1, 0], [], []>} : vector<16x32xf32>, vector<128x32xf32>, vector<16x128xf32> -> vector<16x128xf32>
    %4 = vector.extract_strided_slice %1 {offsets = [0, 0], sizes = [16, 1], strides = [1, 1]} : vector<16x8xf32> to vector<16x1xf32>
    %5 = vector.broadcast %4 : vector<16x1xf32> to vector<16x128xf32>
    %6 = arith.addf %3, %5 : vector<16x128xf32>
    %7 = math.tanh %6 : vector<16x128xf32>
    %c0_5 = arith.constant 0 : index
    %c0_6 = arith.constant 0 : index
    %c0_7 = arith.constant 0 : index
    %8 = vector.load %arg3[%c0_5, %c0_6, %c0_7] : memref<3x16x16xf32, #tpu.memory_space<vmem>>, vector<1x16x16xf32>
    %9 = vector.shape_cast %8 : vector<1x16x16xf32> to vector<16x16xf32>
    %cst_8 = arith.constant dense<0.000000e+00> : vector<16x128xf32>
    %10 = tpu.matmul %9, %7, %cst_8 {dimension_numbers = #tpu.dot_dimension_numbers<[1], [0], [0], [1], [0, 0, 1, 1], [], []>} : vector<16x16xf32>, vector<16x128xf32>, vector<16x128xf32> -> vector<16x128xf32>
    %11 = vector.extract_strided_slice %1 {offsets = [0, 1], sizes = [16, 1], strides = [1, 1]} : vector<16x8xf32> to vector<16x1xf32>
    %12 = vector.broadcast %11 : vector<16x1xf32> to vector<16x128xf32>
    %13 = arith.addf %10, %12 : vector<16x128xf32>
    %14 = math.tanh %13 : vector<16x128xf32>
    %c1 = arith.constant 1 : index
    %c0_9 = arith.constant 0 : index
    %c0_10 = arith.constant 0 : index
    %15 = vector.load %arg3[%c1, %c0_9, %c0_10] : memref<3x16x16xf32, #tpu.memory_space<vmem>>, vector<1x16x16xf32>
    %16 = vector.shape_cast %15 : vector<1x16x16xf32> to vector<16x16xf32>
    %cst_11 = arith.constant dense<0.000000e+00> : vector<16x128xf32>
    %17 = tpu.matmul %16, %14, %cst_11 {dimension_numbers = #tpu.dot_dimension_numbers<[1], [0], [0], [1], [0, 0, 1, 1], [], []>} : vector<16x16xf32>, vector<16x128xf32>, vector<16x128xf32> -> vector<16x128xf32>
    %18 = vector.extract_strided_slice %1 {offsets = [0, 2], sizes = [16, 1], strides = [1, 1]} : vector<16x8xf32> to vector<16x1xf32>
    %19 = vector.broadcast %18 : vector<16x1xf32> to vector<16x128xf32>
    %20 = arith.addf %17, %19 : vector<16x128xf32>
    %21 = math.tanh %20 : vector<16x128xf32>
    %c2 = arith.constant 2 : index
    %c0_12 = arith.constant 0 : index
    %c0_13 = arith.constant 0 : index
    %22 = vector.load %arg3[%c2, %c0_12, %c0_13] : memref<3x16x16xf32, #tpu.memory_space<vmem>>, vector<1x16x16xf32>
    %23 = vector.shape_cast %22 : vector<1x16x16xf32> to vector<16x16xf32>
    %cst_14 = arith.constant dense<0.000000e+00> : vector<16x128xf32>
    %24 = tpu.matmul %23, %21, %cst_14 {dimension_numbers = #tpu.dot_dimension_numbers<[1], [0], [0], [1], [0, 0, 1, 1], [], []>} : vector<16x16xf32>, vector<16x128xf32>, vector<16x128xf32> -> vector<16x128xf32>
    %25 = vector.extract_strided_slice %1 {offsets = [0, 3], sizes = [16, 1], strides = [1, 1]} : vector<16x8xf32> to vector<16x1xf32>
    %26 = vector.broadcast %25 : vector<16x1xf32> to vector<16x128xf32>
    %27 = arith.addf %24, %26 : vector<16x128xf32>
    %28 = math.tanh %27 : vector<16x128xf32>
    %29 = vector.extract_strided_slice %1 {offsets = [0, 5], sizes = [16, 1], strides = [1, 1]} : vector<16x8xf32> to vector<16x1xf32>
    %30 = vector.broadcast %29 : vector<16x1xf32> to vector<16x128xf32>
    %31 = arith.mulf %28, %30 : vector<16x128xf32>
    %cst_15 = arith.constant dense<0.000000e+00> : vector<128xf32>
    %32 = vector.multi_reduction <add>, %31, %cst_15 [0] : vector<16x128xf32> to vector<128xf32>
    %33 = vector.shape_cast %32 : vector<128xf32> to vector<1x128xf32>
    %34 = vector.extract_strided_slice %1 {offsets = [0, 4], sizes = [1, 1], strides = [1, 1]} : vector<16x8xf32> to vector<1x1xf32>
    %35 = vector.broadcast %34 : vector<1x1xf32> to vector<1x128xf32>
    %36 = arith.addf %33, %35 : vector<1x128xf32>
    %37 = arith.negf %36 : vector<1x128xf32>
    %38 = math.exp %37 : vector<1x128xf32>
    %cst_16 = arith.constant 1.000000e+00 : f32
    %39 = vector.broadcast %cst_16 : f32 to vector<1x128xf32>
    %40 = arith.addf %39, %38 : vector<1x128xf32>
    %41 = arith.divf %39, %40 : vector<1x128xf32>
    %c0_17 = arith.constant 0 : index
    %c0_18 = arith.constant 0 : index
    %42 = vector.load %arg5[%c0_17, %c0_18] : memref<1x128xf32, #tpu.memory_space<vmem>>, vector<1x128xf32>
    tpu.vector_store %arg5[%c0_17, %c0_18], %41 {strides = array<i32>} : memref<1x128xf32, #tpu.memory_space<vmem>>, vector<1x128xf32>,
    return
  }
  func.func @transform_0(%arg0: i32) -> (i32, i32) {
    %c0_i32 = arith.constant 0 : i32
    %c0_i32_0 = arith.constant 0 : i32
    return %arg0, %c0_i32 : i32, i32
  }
  func.func @transform_1(%arg0: i32) -> (i32, i32) {
    %c0_i32 = arith.constant 0 : i32
    %c0_i32_0 = arith.constant 0 : i32
    %c0_i32_1 = arith.constant 0 : i32
    return %c0_i32, %c0_i32_0 : i32, i32
  }
  func.func @transform_2(%arg0: i32) -> (i32, i32, i32) {
    %c0_i32 = arith.constant 0 : i32
    %c0_i32_0 = arith.constant 0 : i32
    %c0_i32_1 = arith.constant 0 : i32
    %c0_i32_2 = arith.constant 0 : i32
    return %c0_i32, %c0_i32_0, %c0_i32_1 : i32, i32, i32
  }
  func.func @transform_3(%arg0: i32) -> (i32, i32) {
    %c0_i32 = arith.constant 0 : i32
    %c0_i32_0 = arith.constant 0 : i32
    %c0_i32_1 = arith.constant 0 : i32
    return %c0_i32, %c0_i32_0 : i32, i32
  }
  func.func @transform_4(%arg0: i32) -> (i32, i32) {
    %c0_i32 = arith.constant 0 : i32
    %c0_i32_0 = arith.constant 0 : i32
    return %c0_i32, %arg0 : i32, i32
  }
}

</mosaic_0001>

<llo_original>
// kernel: tpu_custom_call.1
$region0: #{tpu_custom_call.1}
  #allocation0 [shape = 'u32[]', space=smem, size = 0x4, offset = 0x4, fixed_abs, tag = 'smem constant byte address 0x4 - core index']
  #allocation1 [shape = 'u32[144,128]{1,0:T(1,128)}', space=vmem, size = 0x12000, scoped, tag = 'internal scratch']
  %s0 = inlined_call_operand.vmem [shape: f32[256,32], index: 0, kind: input, shape index: {}]
  %s1 = inlined_call_operand.vmem [shape: f32[16,32], index: 1, kind: input, shape index: {}]
  %s2 = inlined_call_operand.vmem [shape: f32[3,16,16], index: 2, kind: input, shape index: {}]
  %s3 = inlined_call_operand.vmem [shape: f32[16,8], index: 3, kind: input, shape index: {}]
  %s4 = inlined_call_operand.hbm [shape: f32[1,256], index: 4, kind: output, shape index: {}]
  %s5 = sld [smem:[#allocation0]]
  $region49: #{tpu_custom_call.1} parent=0
    _
  %s7 = ssub.s32 1, %s5
  %s8 = scalar_select 0, %s7, %s5
  $region1: #{tpu_custom_call.1} parent=0
    #allocation2 [shape = 'u8[1024]{0}', space=vmem, size = 0x400, scoped, tag = 'output window, operand 0']
    #allocation3 [shape = 's32[2]{0}', space=sflag, size = 0x8, scoped, tag = 'scoped memory for tpu_custom_call.1']
    %9 = vsyncpa [#allocation3], 0
    %s10 = scalar_lea.sflag [#allocation3], 1
    %11 = vsyncpa %s10, 0
    loop: start=0, step=1, limit=4
    $region2: #{tpu_custom_call.1} parent=1 // loop_pre_header
      _
    $region3: #{tpu_custom_call.1} parent=1 // loop_header
      %s13 = sphi 0, %s17
      %p14 = scmp.ge.s32.totalorder %s13, 4
      %s23 = sphi 0, %s25
      %s26 = sphi 0, %s23
      %s27 = sphi 0, %s26
      %s43 = sphi 0, %s27
      %s47 = sphi 0, %s47
      %s49 = sphi 0, %s47
      %s50 = sphi 0, %s49
      %s64 = sphi 0, %s50
      %s68 = sphi 0, %s68
      %s70 = sphi 0, %s68
      %s71 = sphi 0, %s70
      %s85 = sphi 0, %s71
      %s89 = sphi 0, %s89
      %s91 = sphi 0, %s89
      %s92 = sphi 0, %s91
      %s106 = sphi 0, %s92
      %s112 = sphi 0, %s114
      %s115 = sphi 0, %s112
      %s116 = sphi 0, %s115
      %s132 = sphi 0, %s116
    $region4: #{tpu_custom_call.1} parent=1 // loop_header_branch
      %16 = sbr.rel (%p14) target = $region8
    $region5: #{tpu_custom_call.1} parent=1 // loop_body
      %s18 = ssub.s32 %s13, 1
      %s19 = ssub.s32 %s13, 2
      %s20 = sadd.s32 %s13, 1
      %s21 = ssub.s32 %s13, %s20
      %p22 = scmp.eq.s32.totalorder %s21, 0
      %s24 = sadd.s32 %s23, 1
      %s25 = scalar_select %p22, %s23, %s24
      %p28 = pneg %p22
      %p29 = scmp.eq.s32.totalorder %s13, 1
      %p30 = por %p28, %p29
      %p31 = scmp.ne.s32.totalorder %s23, %s26
      %p32 = scmp.eq.s32.totalorder %s13, 0
      %p33 = por %p31, %p32
      %p34 = scmp.ne.s32.totalorder %s23, %s26
      %p35 = scmp.eq.s32.totalorder %s18, 1
      %p36 = por %p34, %p35
      %p37 = scmp.ne.s32.totalorder %s26, %s27
      %p38 = scmp.eq.s32.totalorder %s18, 0
      %p39 = por %p37, %p38
      %p40 = scmp.ne.s32.totalorder %s26, %s27
      %p41 = scmp.eq.s32.totalorder %s19, 1
      %p42 = por %p40, %p41
      %p44 = scmp.ne.s32.totalorder %s27, %s43
      %p45 = scmp.eq.s32.totalorder %s19, 0
      %p46 = por %p44, %p45
      %s48 = sadd.s32 %s47, 1
      %p51 = scmp.eq.s32.totalorder %s13, 1
      %p52 = scmp.ne.s32.totalorder %s47, %s49
      %p53 = scmp.eq.s32.totalorder %s13, 0
      %p54 = por %p52, %p53
      %p55 = scmp.ne.s32.totalorder %s47, %s49
      %p56 = scmp.eq.s32.totalorder %s18, 1
      %p57 = por %p55, %p56
      %p58 = scmp.ne.s32.totalorder %s49, %s50
      %p59 = scmp.eq.s32.totalorder %s18, 0
      %p60 = por %p58, %p59
      %p61 = scmp.ne.s32.totalorder %s49, %s50
      %p62 = scmp.eq.s32.totalorder %s19, 1
      %p63 = por %p61, %p62
      %p65 = scmp.ne.s32.totalorder %s50, %s64
      %p66 = scmp.eq.s32.totalorder %s19, 0
      %p67 = por %p65, %p66
      %s69 = sadd.s32 %s68, 1
      %p72 = scmp.eq.s32.totalorder %s13, 1
      %p73 = scmp.ne.s32.totalorder %s68, %s70
      %p74 = scmp.eq.s32.totalorder %s13, 0
      %p75 = por %p73, %p74
      %p76 = scmp.ne.s32.totalorder %s68, %s70
      %p77 = scmp.eq.s32.totalorder %s18, 1
      %p78 = por %p76, %p77
      %p79 = scmp.ne.s32.totalorder %s70, %s71
      %p80 = scmp.eq.s32.totalorder %s18, 0
      %p81 = por %p79, %p80
      %p82 = scmp.ne.s32.totalorder %s70, %s71
      %p83 = scmp.eq.s32.totalorder %s19, 1
      %p84 = por %p82, %p83
      %p86 = scmp.ne.s32.totalorder %s71, %s85
      %p87 = scmp.eq.s32.totalorder %s19, 0
      %p88 = por %p86, %p87
      %s90 = sadd.s32 %s89, 1
      %p93 = scmp.eq.s32.totalorder %s13, 1
      %p94 = scmp.ne.s32.totalorder %s89, %s91
      %p95 = scmp.eq.s32.totalorder %s13, 0
      %p96 = por %p94, %p95
      %p97 = scmp.ne.s32.totalorder %s89, %s91
      %p98 = scmp.eq.s32.totalorder %s18, 1
      %p99 = por %p97, %p98
      %p100 = scmp.ne.s32.totalorder %s91, %s92
      %p101 = scmp.eq.s32.totalorder %s18, 0
      %p102 = por %p100, %p101
      %p103 = scmp.ne.s32.totalorder %s91, %s92
      %p104 = scmp.eq.s32.totalorder %s19, 1
      %p105 = por %p103, %p104
      %p107 = scmp.ne.s32.totalorder %s92, %s106
      %p108 = scmp.eq.s32.totalorder %s19, 0
      %p109 = por %p107, %p108
      %s110 = ssub.s32 %s13, %s20
      %p111 = scmp.eq.s32.totalorder %s110, 0
      %s113 = sadd.s32 %s112, 1
      %s114 = scalar_select %p111, %s112, %s113
      %p117 = pneg %p111
      %p118 = scmp.eq.s32.totalorder %s13, 1
      %p119 = por %p117, %p118
      %p120 = scmp.ne.s32.totalorder %s112, %s115
      %p121 = scmp.eq.s32.totalorder %s13, 0
      %p122 = por %p120, %p121
      %p123 = scmp.ne.s32.totalorder %s112, %s115
      %p124 = scmp.eq.s32.totalorder %s18, 1
      %p125 = por %p123, %p124
      %p126 = scmp.ne.s32.totalorder %s115, %s116
      %p127 = scmp.eq.s32.totalorder %s18, 0
      %p128 = por %p126, %p127
      %p129 = scmp.ne.s32.totalorder %s115, %s116
      %p130 = scmp.eq.s32.totalorder %s19, 1
      %p131 = por %p129, %p130
      %p133 = scmp.ne.s32.totalorder %s116, %s132
      %p134 = scmp.eq.s32.totalorder %s19, 0
      %p135 = por %p133, %p134
      %p136 = scmp.le.s32.totalorder 1, %s13
      %p137 = scmp.lt.s32.totalorder %s13, 3
      %p138 = pnand %p136, %p137
      %p139 = pneg %p138
      // Predicated region
      $region9: #{tpu_custom_call.1} parent=5 // pred_check
        _
      $region10: #{tpu_custom_call.1} parent=5 // pred_check_branch
        %141 = sbr.rel (%p138) target = $region12
      $region11: #{tpu_custom_call.1} parent=5 // pred_region
        %s142 = ssub.s32 %s13, 1
        // Predicated region
        $region13: #{tpu_custom_call.1} parent=11 // pred_check
          %p143 = pneg %p60
        $region14: #{tpu_custom_call.1} parent=11 // pred_check_branch
          %145 = sbr.rel (%p143) target = $region16
        $region15: #{tpu_custom_call.1} parent=11 // pred_region
          _
        $region16: #{tpu_custom_call.1} parent=11 // pred_fallthru
          _
        // Predicated region
        $region17: #{tpu_custom_call.1} parent=11 // pred_check
          %p146 = pneg %p81
        $region18: #{tpu_custom_call.1} parent=11 // pred_check_branch
          %148 = sbr.rel (%p146) target = $region20
        $region19: #{tpu_custom_call.1} parent=11 // pred_region
          _
        $region20: #{tpu_custom_call.1} parent=11 // pred_fallthru
          _
        // Predicated region
        $region21: #{tpu_custom_call.1} parent=11 // pred_check
          %p149 = pneg %p102
        $region22: #{tpu_custom_call.1} parent=11 // pred_check_branch
          %151 = sbr.rel (%p149) target = $region24
        $region23: #{tpu_custom_call.1} parent=11 // pred_region
          _
        $region24: #{tpu_custom_call.1} parent=11 // pred_fallthru
          _
      $region12: #{tpu_custom_call.1} parent=5 // pred_fallthru
        _
      %p152 = scmp.lt.s32.totalorder %s13, 2
      // Predicated region
      $region25: #{tpu_custom_call.1} parent=5 // pred_check
        %p153 = pneg %p152
      $region26: #{tpu_custom_call.1} parent=5 // pred_check_branch
        %155 = sbr.rel (%p153) target = $region28
      $region27: #{tpu_custom_call.1} parent=5 // pred_region
        // Predicated region
        $region29: #{tpu_custom_call.1} parent=27 // pred_check
          %p156 = pneg %p33
        $region30: #{tpu_custom_call.1} parent=27 // pred_check_branch
          %158 = sbr.rel (%p156) target = $region32
        $region31: #{tpu_custom_call.1} parent=27 // pred_region
          %s159 = smul.u32 16, %s13
          %p160 = scmp.lt.s32.totalorder %s159, 31
          %s161 = scalar_select %p160, %s159, 31
          %s162 = smul.addr %s161, 8
          %s163 = scalar_lea.vmem %s0, %s162
          %s164 = smul.u32 16, %s13
        $region32: #{tpu_custom_call.1} parent=27 // pred_fallthru
          _
      $region28: #{tpu_custom_call.1} parent=5 // pred_fallthru
        _
      %p165 = scmp.le.s32.totalorder 1, %s13
      %p166 = scmp.lt.s32.totalorder %s13, 3
      %p167 = pnand %p165, %p166
      %p168 = pneg %p167
      // Predicated region
      $region33: #{tpu_custom_call.1} parent=5 // pred_check
        _
      $region34: #{tpu_custom_call.1} parent=5 // pred_check_branch
        %170 = sbr.rel (%p167) target = $region36
      $region35: #{tpu_custom_call.1} parent=5 // pred_region
        %s171 = ssub.s32 %s13, 1
        %s172 = smul.u32 16, %s18
        %p173 = scmp.lt.s32.totalorder %s172, 31
        %s174 = scalar_select %p173, %s172, 31
        %s175 = smul.addr %s174, 8
        %s176 = scalar_lea.vmem %s0, %s175
        %p177 = pneg %p39
        %p178 = pneg %p36
        %p179 = pneg %p60
        %p180 = pneg %p57
        %p181 = pneg %p81
        %p182 = pneg %p78
        %p183 = pneg %p102
        %p184 = pneg %p99
        %p185 = pneg %p128
        %p186 = pneg %p125
        %s187 = sand.u32 %s115, 1
        %s188 = scalar_lea.sflag [#allocation3], %s187
        %s189 = sand.u32 %s115, 1
        %s190 = scalar_lea.vmem [#allocation2], %s189
        %s191 = smul.u32 16, %s18
        %p192 = scmp.lt.s32.totalorder %s191, 31
        %s193 = scalar_select %p192, %s191, 31
        %s194 = smul.addr %s193, 8
        %s195 = scalar_lea.vmem %s0, %s194
        %s196 = smul.u32 16, %s18
        %v197 = vld [vmem:[%s195] sm:$0xff]
        %v198 = vld [vmem:[%s195 + $0x8] sm:$0xff]
        %v199 = vld [vmem:[%s195 + $0x10] sm:$0xff]
        %v200 = vld [vmem:[%s195 + $0x18] sm:$0xff]
        %v201 = vld [vmem:[%s195 + $0x20] sm:$0xff]
        %v202 = vld [vmem:[%s195 + $0x28] sm:$0xff]
        %v203 = vld [vmem:[%s195 + $0x30] sm:$0xff]
        %v204 = vld [vmem:[%s195 + $0x38] sm:$0xff]
        %v205 = vld [vmem:[%s195 + $0x40] sm:$0xff]
        %v206 = vld [vmem:[%s195 + $0x48] sm:$0xff]
        %v207 = vld [vmem:[%s195 + $0x50] sm:$0xff]
        %v208 = vld [vmem:[%s195 + $0x58] sm:$0xff]
        %v209 = vld [vmem:[%s195 + $0x60] sm:$0xff]
        %v210 = vld [vmem:[%s195 + $0x68] sm:$0xff]
        %v211 = vld [vmem:[%s195 + $0x70] sm:$0xff]
        %v212 = vld [vmem:[%s195 + $0x78] sm:$0xff]
        %v213 = vld [vmem:[%s3] sm:$0xff]
        %v214 = vld [vmem:[%s3 + $0x8] sm:$0xff]
        %v215 = vld [vmem:[%s1] sm:$0xff]
        %v216 = vld [vmem:[%s1 + $0x8] sm:$0xff]
        %218 = vset.pattern.permute.xlu0 0
        %219 = vperm.xlu0 %218, %v213
        %v220 = vpop.permute.xlu0 %219
        %223 = vset.pattern.permute.xlu0 0
        %224 = vperm.xlu0 %223, %v214
        %v225 = vpop.permute.xlu0 %224
        %vm227 = vcmask 261120
        %v229 = vsel %vm227, %v215, 0
        %v232 = vsel %vm227, %v216, 0
        %v235 = vsel %vm227, %v197, 0
        %v238 = vsel %vm227, %v198, 0
        %v241 = vsel %vm227, %v199, 0
        %v244 = vsel %vm227, %v200, 0
        %v247 = vsel %vm227, %v201, 0
        %v250 = vsel %vm227, %v202, 0
        %v253 = vsel %vm227, %v203, 0
        %v256 = vsel %vm227, %v204, 0
        %v259 = vsel %vm227, %v205, 0
        %v262 = vsel %vm227, %v206, 0
        %v265 = vsel %vm227, %v207, 0
        %v268 = vsel %vm227, %v208, 0
        %v271 = vsel %vm227, %v209, 0
        %v274 = vsel %vm227, %v210, 0
        %v277 = vsel %vm227, %v211, 0
        %v280 = vsel %vm227, %v212, 0
        %282 = vmatprep.subr.mxu0 0.0
        %283 = vmatpush1.xpose.msra.mxu0 %v235
        %284 = vmatprep.subr.mxu0 0.0
        %285 = vmatpush1.xpose.msra.mxu0 %v238
        %286 = vmatprep.subr.mxu0 0.0
        %287 = vmatpush1.xpose.msra.mxu0 %v241
        %288 = vmatprep.subr.mxu0 0.0
        %289 = vmatpush1.xpose.msra.mxu0 %v244
        %290 = vmatprep.subr.mxu0 0.0
        %291 = vmatpush1.xpose.msra.mxu0 %v247
        %292 = vmatprep.subr.mxu0 0.0
        %293 = vmatpush1.xpose.msra.mxu0 %v250
        %294 = vmatprep.subr.mxu0 0.0
        %295 = vmatpush1.xpose.msra.mxu0 %v253
        %296 = vmatprep.subr.mxu0 0.0
        %297 = vmatpush1.xpose.msra.mxu0 %v256
        %298 = vmatprep.subr.mxu0 0.0
        %299 = vmatpush1.xpose.msra.mxu0 %v259
        %300 = vmatprep.subr.mxu0 0.0
        %301 = vmatpush1.xpose.msra.mxu0 %v262
        %302 = vmatprep.subr.mxu0 0.0
        %303 = vmatpush1.xpose.msra.mxu0 %v265
        %304 = vmatprep.subr.mxu0 0.0
        %305 = vmatpush1.xpose.msra.mxu0 %v268
        %306 = vmatprep.subr.mxu0 0.0
        %307 = vmatpush1.xpose.msra.mxu0 %v271
        %308 = vmatprep.subr.mxu0 0.0
        %309 = vmatpush1.xpose.msra.mxu0 %v274
        %310 = vmatprep.subr.mxu0 0.0
        %311 = vmatpush1.xpose.msra.mxu0 %v277
        %312 = vmatprep.subr.mxu0 0.0
        %313 = vmatpush1.xpose.msra.mxu0 %v280
        %314 = vmatprep.subr.mxu0 0.0
        %315 = vmatpush1.xpose.msra.mxu0 0.0
        %316 = vmatprep.subr.mxu0 0.0
        %317 = vmatpush1.xpose.msra.mxu0 0.0
        %318 = vmatprep.subr.mxu0 0.0
        %319 = vmatpush1.xpose.msra.mxu0 0.0
        %320 = vmatprep.subr.mxu0 0.0
        %321 = vmatpush1.xpose.msra.mxu0 0.0
        %322 = vmatprep.subr.mxu0 0.0
        %323 = vmatpush1.xpose.msra.mxu0 0.0
        %324 = vmatprep.subr.mxu0 0.0
        %325 = vmatpush1.xpose.msra.mxu0 0.0
        %326 = vmatprep.subr.mxu0 0.0
        %327 = vmatpush1.xpose.msra.mxu0 0.0
        %328 = vmatprep.subr.mxu0 0.0
        %329 = vmatpush1.xpose.msra.mxu0 0.0
        %330 = vmatprep.subr.mxu0 0.0
        %331 = vmatpush1.xpose.msra.mxu0 0.0
        %332 = vmatprep.subr.mxu0 0.0
        %333 = vmatpush1.xpose.msra.mxu0 0.0
        %334 = vmatprep.subr.mxu0 0.0
        %335 = vmatpush1.xpose.msra.mxu0 0.0
        %336 = vmatprep.subr.mxu0 0.0
        %337 = vmatpush1.xpose.msra.mxu0 0.0
        %338 = vmatprep.subr.mxu0 0.0
        %339 = vmatpush1.xpose.msra.mxu0 0.0
        %340 = vmatprep.subr.mxu0 0.0
        %341 = vmatpush1.xpose.msra.mxu0 0.0
        %342 = vmatprep.subr.mxu0 0.0
        %343 = vmatpush1.xpose.msra.mxu0 0.0
        %344 = vmatprep.subr.mxu0 0.0
        %345 = vmatpush1.xpose.msra.mxu0 0.0
        %346 = vmatprep.mubr.f32.mxu0 0.0
        %347 = vmatmul.mubr.f32.gmra.mrb[0].mxu0 %v229
        %v348 = vpop.f32.mrb[0].mxu0
        %v349 = vadd.f32 %v220, %v348
        %v350 = vpop.f32.mrb[0].mxu0
        %351 = vmatprep.mubr.f32.mxu0 0.0
        %352 = vmatmul.mubr.f32.gmra.mrb[0].mxu0 %v232
        %v353 = vpop.f32.mrb[0].mxu0
        %v354 = vadd.f32 %v225, %v353
        %v355 = vpop.f32.mrb[0].mxu0
        %356 = vdwg.mxu0
        %v357 = vtanh.pop %v349
        %v358 = vtanh.pop %v354
        %v359 = vld [vmem:[%s2] sm:$0xff]
        %v360 = vld [vmem:[%s2 + $0x8] sm:$0xff]
        %361 = vset.pattern.permute.xlu0 1
        %362 = vperm.xlu0 %361, %v213
        %v363 = vpop.permute.xlu0 %362
        %365 = vset.pattern.permute.xlu0 1
        %366 = vperm.xlu0 %365, %v214
        %v367 = vpop.permute.xlu0 %366
        %vm369 = vcmask 130048
        %v371 = vsel %vm369, %v359, 0
        %v374 = vsel %vm369, %v360, 0
        %376 = vmatprep.subr.mxu0 0.0
        %377 = vmatpush1.msra.mxu0 %v357
        %378 = vmatprep.subr.mxu0 0.0
        %379 = vmatpush1.msra.mxu0 %v358
        %380 = vmatprep.subr.mxu0 0.0
        %381 = vmatpush1.msra.mxu0 0.0
        %382 = vmatprep.subr.mxu0 0.0
        %383 = vmatpush1.msra.mxu0 0.0
        %384 = vmatprep.subr.mxu0 0.0
        %385 = vmatpush1.msra.mxu0 0.0
        %386 = vmatprep.subr.mxu0 0.0
        %387 = vmatpush1.msra.mxu0 0.0
        %388 = vmatprep.subr.mxu0 0.0
        %389 = vmatpush1.msra.mxu0 0.0
        %390 = vmatprep.subr.mxu0 0.0
        %391 = vmatpush1.msra.mxu0 0.0
        %392 = vmatprep.subr.mxu0 0.0
        %393 = vmatpush1.msra.mxu0 0.0
        %394 = vmatprep.subr.mxu0 0.0
        %395 = vmatpush1.msra.mxu0 0.0
        %396 = vmatprep.subr.mxu0 0.0
        %397 = vmatpush1.msra.mxu0 0.0
        %398 = vmatprep.subr.mxu0 0.0
        %399 = vmatpush1.msra.mxu0 0.0
        %400 = vmatprep.subr.mxu0 0.0
        %401 = vmatpush1.msra.mxu0 0.0
        %402 = vmatprep.subr.mxu0 0.0
        %403 = vmatpush1.msra.mxu0 0.0
        %404 = vmatprep.subr.mxu0 0.0
        %405 = vmatpush1.msra.mxu0 0.0
        %406 = vmatprep.subr.mxu0 0.0
        %407 = vmatpush1.msra.mxu0 0.0
        %408 = vmatprep.subr.mxu0 0.0
        %409 = vmatpush1.msra.mxu0 0.0
        %410 = vmatprep.subr.mxu0 0.0
        %411 = vmatpush1.msra.mxu0 0.0
        %412 = vmatprep.subr.mxu0 0.0
        %413 = vmatpush1.msra.mxu0 0.0
        %414 = vmatprep.subr.mxu0 0.0
        %415 = vmatpush1.msra.mxu0 0.0
        %416 = vmatprep.subr.mxu0 0.0
        %417 = vmatpush1.msra.mxu0 0.0
        %418 = vmatprep.subr.mxu0 0.0
        %419 = vmatpush1.msra.mxu0 0.0
        %420 = vmatprep.subr.mxu0 0.0
        %421 = vmatpush1.msra.mxu0 0.0
        %422 = vmatprep.subr.mxu0 0.0
        %423 = vmatpush1.msra.mxu0 0.0
        %424 = vmatprep.subr.mxu0 0.0
        %425 = vmatpush1.msra.mxu0 0.0
        %426 = vmatprep.subr.mxu0 0.0
        %427 = vmatpush1.msra.mxu0 0.0
        %428 = vmatprep.subr.mxu0 0.0
        %429 = vmatpush1.msra.mxu0 0.0
        %430 = vmatprep.subr.mxu0 0.0
        %431 = vmatpush1.msra.mxu0 0.0
        %432 = vmatprep.subr.mxu0 0.0
        %433 = vmatpush1.msra.mxu0 0.0
        %434 = vmatprep.subr.mxu0 0.0
        %435 = vmatpush1.msra.mxu0 0.0
        %436 = vmatprep.subr.mxu0 0.0
        %437 = vmatpush1.msra.mxu0 0.0
        %438 = vmatprep.subr.mxu0 0.0
        %439 = vmatpush1.msra.mxu0 0.0
        %440 = vmatprep.mubr.f32.mxu0 0.0
        %441 = vmatmul.mubr.f32.gmra.mrb[0].mxu0 %v371
        %v442 = vpop.f32.mrb[0].mxu0
        %v443 = vadd.f32 %v363, %v442
        %v444 = vpop.f32.mrb[0].mxu0
        %445 = vmatprep.mubr.f32.mxu0 0.0
        %446 = vmatmul.mubr.f32.gmra.mrb[0].mxu0 %v374
        %v447 = vpop.f32.mrb[0].mxu0
        %v448 = vadd.f32 %v367, %v447
        %v449 = vpop.f32.mrb[0].mxu0
        %450 = vdwg.mxu0
        %v451 = vtanh.pop %v443
        %v452 = vtanh.pop %v448
        %s453 = scalar_lea.vmem %s2, 16
        %v454 = vld [vmem:[%s453] sm:$0xff]
        %v455 = vld [vmem:[%s453 + $0x8] sm:$0xff]
        %456 = vset.pattern.permute.xlu0 2
        %457 = vperm.xlu0 %456, %v213
        %v458 = vpop.permute.xlu0 %457
        %460 = vset.pattern.permute.xlu0 2
        %461 = vperm.xlu0 %460, %v214
        %v462 = vpop.permute.xlu0 %461
        %v465 = vsel %vm369, %v454, 0
        %v468 = vsel %vm369, %v455, 0
        %470 = vmatprep.subr.mxu0 0.0
        %471 = vmatpush1.msra.mxu0 %v451
        %472 = vmatprep.subr.mxu0 0.0
        %473 = vmatpush1.msra.mxu0 %v452
        %474 = vmatprep.subr.mxu0 0.0
        %475 = vmatpush1.msra.mxu0 0.0
        %476 = vmatprep.subr.mxu0 0.0
        %477 = vmatpush1.msra.mxu0 0.0
        %478 = vmatprep.subr.mxu0 0.0
        %479 = vmatpush1.msra.mxu0 0.0
        %480 = vmatprep.subr.mxu0 0.0
        %481 = vmatpush1.msra.mxu0 0.0
        %482 = vmatprep.subr.mxu0 0.0
        %483 = vmatpush1.msra.mxu0 0.0
        %484 = vmatprep.subr.mxu0 0.0
        %485 = vmatpush1.msra.mxu0 0.0
        %486 = vmatprep.subr.mxu0 0.0
        %487 = vmatpush1.msra.mxu0 0.0
        %488 = vmatprep.subr.mxu0 0.0
        %489 = vmatpush1.msra.mxu0 0.0
        %490 = vmatprep.subr.mxu0 0.0
        %491 = vmatpush1.msra.mxu0 0.0
        %492 = vmatprep.subr.mxu0 0.0
        %493 = vmatpush1.msra.mxu0 0.0
        %494 = vmatprep.subr.mxu0 0.0
        %495 = vmatpush1.msra.mxu0 0.0
        %496 = vmatprep.subr.mxu0 0.0
        %497 = vmatpush1.msra.mxu0 0.0
        %498 = vmatprep.subr.mxu0 0.0
        %499 = vmatpush1.msra.mxu0 0.0
        %500 = vmatprep.subr.mxu0 0.0
        %501 = vmatpush1.msra.mxu0 0.0
        %502 = vmatprep.subr.mxu0 0.0
        %503 = vmatpush1.msra.mxu0 0.0
        %504 = vmatprep.subr.mxu0 0.0
        %505 = vmatpush1.msra.mxu0 0.0
        %506 = vmatprep.subr.mxu0 0.0
        %507 = vmatpush1.msra.mxu0 0.0
        %508 = vmatprep.subr.mxu0 0.0
        %509 = vmatpush1.msra.mxu0 0.0
        %510 = vmatprep.subr.mxu0 0.0
        %511 = vmatpush1.msra.mxu0 0.0
        %512 = vmatprep.subr.mxu0 0.0
        %513 = vmatpush1.msra.mxu0 0.0
        %514 = vmatprep.subr.mxu0 0.0
        %515 = vmatpush1.msra.mxu0 0.0
        %516 = vmatprep.subr.mxu0 0.0
        %517 = vmatpush1.msra.mxu0 0.0
        %518 = vmatprep.subr.mxu0 0.0
        %519 = vmatpush1.msra.mxu0 0.0
        %520 = vmatprep.subr.mxu0 0.0
        %521 = vmatpush1.msra.mxu0 0.0
        %522 = vmatprep.subr.mxu0 0.0
        %523 = vmatpush1.msra.mxu0 0.0
        %524 = vmatprep.subr.mxu0 0.0
        %525 = vmatpush1.msra.mxu0 0.0
        %526 = vmatprep.subr.mxu0 0.0
        %527 = vmatpush1.msra.mxu0 0.0
        %528 = vmatprep.subr.mxu0 0.0
        %529 = vmatpush1.msra.mxu0 0.0
        %530 = vmatprep.subr.mxu0 0.0
        %531 = vmatpush1.msra.mxu0 0.0
        %532 = vmatprep.subr.mxu0 0.0
        %533 = vmatpush1.msra.mxu0 0.0
        %534 = vmatprep.mubr.f32.mxu0 0.0
        %535 = vmatmul.mubr.f32.gmra.mrb[0].mxu0 %v465
        %v536 = vpop.f32.mrb[0].mxu0
        %v537 = vadd.f32 %v458, %v536
        %v538 = vpop.f32.mrb[0].mxu0
        %539 = vmatprep.mubr.f32.mxu0 0.0
        %540 = vmatmul.mubr.f32.gmra.mrb[0].mxu0 %v468
        %v541 = vpop.f32.mrb[0].mxu0
        %v542 = vadd.f32 %v462, %v541
        %v543 = vpop.f32.mrb[0].mxu0
        %544 = vdwg.mxu0
        %v545 = vtanh.pop %v537
        %v546 = vtanh.pop %v542
        %s547 = scalar_lea.vmem %s2, 32
        %v548 = vld [vmem:[%s547] sm:$0xff]
        %v549 = vld [vmem:[%s547 + $0x8] sm:$0xff]
        %550 = vset.pattern.permute.xlu0 3
        %551 = vperm.xlu0 %550, %v213
        %v552 = vpop.permute.xlu0 %551
        %554 = vset.pattern.permute.xlu0 3
        %555 = vperm.xlu0 %554, %v214
        %v556 = vpop.permute.xlu0 %555
        %v559 = vsel %vm369, %v548, 0
        %v562 = vsel %vm369, %v549, 0
        %564 = vmatprep.subr.mxu0 0.0
        %565 = vmatpush1.msra.mxu0 %v545
        %566 = vmatprep.subr.mxu0 0.0
        %567 = vmatpush1.msra.mxu0 %v546
        %568 = vmatprep.subr.mxu0 0.0
        %569 = vmatpush1.msra.mxu0 0.0
        %570 = vmatprep.subr.mxu0 0.0
        %571 = vmatpush1.msra.mxu0 0.0
        %572 = vmatprep.subr.mxu0 0.0
        %573 = vmatpush1.msra.mxu0 0.0
        %574 = vmatprep.subr.mxu0 0.0
        %575 = vmatpush1.msra.mxu0 0.0
        %576 = vmatprep.subr.mxu0 0.0
        %577 = vmatpush1.msra.mxu0 0.0
        %578 = vmatprep.subr.mxu0 0.0
        %579 = vmatpush1.msra.mxu0 0.0
        %580 = vmatprep.subr.mxu0 0.0
        %581 = vmatpush1.msra.mxu0 0.0
        %582 = vmatprep.subr.mxu0 0.0
        %583 = vmatpush1.msra.mxu0 0.0
        %584 = vmatprep.subr.mxu0 0.0
        %585 = vmatpush1.msra.mxu0 0.0
        %586 = vmatprep.subr.mxu0 0.0
        %587 = vmatpush1.msra.mxu0 0.0
        %588 = vmatprep.subr.mxu0 0.0
        %589 = vmatpush1.msra.mxu0 0.0
        %590 = vmatprep.subr.mxu0 0.0
        %591 = vmatpush1.msra.mxu0 0.0
        %592 = vmatprep.subr.mxu0 0.0
        %593 = vmatpush1.msra.mxu0 0.0
        %594 = vmatprep.subr.mxu0 0.0
        %595 = vmatpush1.msra.mxu0 0.0
        %596 = vmatprep.subr.mxu0 0.0
        %597 = vmatpush1.msra.mxu0 0.0
        %598 = vmatprep.subr.mxu0 0.0
        %599 = vmatpush1.msra.mxu0 0.0
        %600 = vmatprep.subr.mxu0 0.0
        %601 = vmatpush1.msra.mxu0 0.0
        %602 = vmatprep.subr.mxu0 0.0
        %603 = vmatpush1.msra.mxu0 0.0
        %604 = vmatprep.subr.mxu0 0.0
        %605 = vmatpush1.msra.mxu0 0.0
        %606 = vmatprep.subr.mxu0 0.0
        %607 = vmatpush1.msra.mxu0 0.0
        %608 = vmatprep.subr.mxu0 0.0
        %609 = vmatpush1.msra.mxu0 0.0
        %610 = vmatprep.subr.mxu0 0.0
        %611 = vmatpush1.msra.mxu0 0.0
        %612 = vmatprep.subr.mxu0 0.0
        %613 = vmatpush1.msra.mxu0 0.0
        %614 = vmatprep.subr.mxu0 0.0
        %615 = vmatpush1.msra.mxu0 0.0
        %616 = vmatprep.subr.mxu0 0.0
        %617 = vmatpush1.msra.mxu0 0.0
        %618 = vmatprep.subr.mxu0 0.0
        %619 = vmatpush1.msra.mxu0 0.0
        %620 = vmatprep.subr.mxu0 0.0
        %621 = vmatpush1.msra.mxu0 0.0
        %622 = vmatprep.subr.mxu0 0.0
        %623 = vmatpush1.msra.mxu0 0.0
        %624 = vmatprep.subr.mxu0 0.0
        %625 = vmatpush1.msra.mxu0 0.0
        %626 = vmatprep.subr.mxu0 0.0
        %627 = vmatpush1.msra.mxu0 0.0
        %628 = vmatprep.mubr.f32.mxu0 0.0
        %629 = vmatmul.mubr.f32.gmra.mrb[0].mxu0 %v559
        %v630 = vpop.f32.mrb[0].mxu0
        %v631 = vadd.f32 %v552, %v630
        %v632 = vpop.f32.mrb[0].mxu0
        %633 = vmatprep.mubr.f32.mxu0 0.0
        %634 = vmatmul.mubr.f32.gmra.mrb[0].mxu0 %v562
        %v635 = vpop.f32.mrb[0].mxu0
        %v636 = vadd.f32 %v556, %v635
        %v637 = vpop.f32.mrb[0].mxu0
        %638 = vdwg.mxu0
        %v639 = vtanh.pop %v631
        %v640 = vtanh.pop %v636
        %641 = vset.pattern.permute.xlu0 5
        %642 = vperm.xlu0 %641, %v213
        %v643 = vpop.permute.xlu0 %642
        %645 = vset.pattern.permute.xlu0 5
        %646 = vperm.xlu0 %645, %v214
        %v647 = vpop.permute.xlu0 %646
        %v649 = vmul.f32 %v639, %v643
        %v650 = vmul.f32 %v640, %v647
        %v651 = vadd.f32 %v649, %v650
        %v652 = vrot.slane %v651, 4
        %v653 = vadd.f32 %v651, %v652
        %v654 = vrot.slane %v653, 2
        %v655 = vadd.f32 %v653, %v654
        %v656 = vrot.slane %v655, 1
        %v657 = vadd.f32 %v655, %v656
        %658 = vset.pattern.permute.xlu0 4
        %659 = vperm.xlu0 %658, %v213
        %v660 = vpop.permute.xlu0 %659
        %v662 = vadd.f32 %v657, %v660
        %v663 = vxor.u32 %v662, 2147483648
        %v664 = vmul.f32 %v663, 1.442695
        %v665 = vpow.pop %v664
        %v666 = vadd.f32 %v665, 1.0
        %v667 = vrcp.pop %v666
        %v668 = vmul.f32 1.0, %v667
        %669 = vst [vmem:[%s190] sm:$0x1] %v668
        %s670 = sand.u32 %s115, 1
        %s671 = scalar_lea.sflag [#allocation3], %s670
        %s672 = sand.u32 %s115, 1
        %s673 = scalar_lea.vmem [#allocation2], %s672
        // Predicated region
        $region37: #{tpu_custom_call.1} parent=35 // pred_check
          %p674 = pneg %p125
        $region38: #{tpu_custom_call.1} parent=35 // pred_check_branch
          %676 = sbr.rel (%p674) target = $region40
        $region39: #{tpu_custom_call.1} parent=35 // pred_region
          %s678 = ssub.s32 16, 16
          %679 = vsyncadd %s671, %s678
          %s680 = smul.addr %s18, 16
          %s681 = scalar_lea.hbm %s4, %s680
          %s683 = sshll.u32 %s673, 4
          %s684 = int_to_ptr.vmem [resolvable:$true] %s683
          %686 = dma.vmem_to_hbm [thread:$0]  %s684, 16, %s681, %s671
        $region40: #{tpu_custom_call.1} parent=35 // pred_fallthru
          _
      $region36: #{tpu_custom_call.1} parent=5 // pred_fallthru
        _
      %p687 = scmp.le.s32.totalorder 2, %s13
      // Predicated region
      $region41: #{tpu_custom_call.1} parent=5 // pred_check
        %p688 = pneg %p687
      $region42: #{tpu_custom_call.1} parent=5 // pred_check_branch
        %690 = sbr.rel (%p688) target = $region44
      $region43: #{tpu_custom_call.1} parent=5 // pred_region
        %s691 = ssub.s32 %s13, 2
        // Predicated region
        $region45: #{tpu_custom_call.1} parent=43 // pred_check
          %p692 = pneg %p131
        $region46: #{tpu_custom_call.1} parent=43 // pred_check_branch
          %694 = sbr.rel (%p692) target = $region48
        $region47: #{tpu_custom_call.1} parent=43 // pred_region
          %s695 = sand.u32 %s116, 1
          %s696 = scalar_lea.sflag [#allocation3], %s695
          %s697 = sand.u32 %s116, 1
          %s698 = scalar_lea.vmem [#allocation2], %s697
          %699 = dma.done %s696, 16
        $region48: #{tpu_custom_call.1} parent=43 // pred_fallthru
          _
      $region44: #{tpu_custom_call.1} parent=5 // pred_fallthru
        _
    $region6: #{tpu_custom_call.1} parent=1 // loop_footer
      %s17 = sadd.s32 1, %s13
    $region7: #{tpu_custom_call.1} parent=1 // loop_footer_branch
      %12 = sbr.rel target = $region3
    $region8: #{tpu_custom_call.1} parent=1 // loop_exit
      _
    %700 = vsyncpa [#allocation3], 1
    %s701 = scalar_lea.sflag [#allocation3], 1
    %702 = vsyncpa %s701, 1

</llo_original>
